<compile_context>
chip_gen: v5e
topology: v5e:2x2
jax: 0.10.0
libtpu: 0.0.40
codegen_flags: <defaults>
</compile_context>

<pallas_src>
import math
import numpy as np
import jax
import jax.numpy as jnp
from jax import lax
from jax.experimental import pallas as pl
from jax.experimental.pallas import tpu as pltpu

LAYER1 = 100
LAYER2 = 40
KERNEL_SIZE = 3
M_SIZE = 8
OUT_CHANNELS = 20
IN_CHANNELS = 5
H = M_SIZE                  # 8
W = M_SIZE // 2             # 4
PH, PW = H // 2, W // 2     # 4, 2
P_SIZE = OUT_CHANNELS * PH * PW                 # 160 pooled features / sample
N_IN = IN_CHANNELS * H * W                      # 160 raw values / sample

BLK = 256        # per pool-window column block (160 real + pad) -> lane aligned
OUT_LANES = 128  # fused lane-dense output: [0:40]=policy, [40]=value, rest pad
TB_MAX = 512     # batch tile (padded samples per grid step)


def _net_kernel(x_ref, wc_ref, bc_ref, w1_ref, b1_ref, wh_ref, bh_ref, out_ref):
    # conv1 as one dense bf16 matmul (f32 accumulate) + bias + relu
    conv = jnp.dot(x_ref[...], wc_ref[...],
                   preferred_element_type=jnp.float32) + bc_ref[...]
    conv = jnp.maximum(conv, 0.0)                     # (tb, 4*BLK) f32

    # 2x2 max-pool == elementwise max over the 4 lane-aligned column blocks;
    # resulting columns 0:160 are ordered (c, ph, pw) == PyTorch flatten order.
    pooled = jnp.maximum(
        jnp.maximum(conv[:, 0 * BLK:1 * BLK], conv[:, 1 * BLK:2 * BLK]),
        jnp.maximum(conv[:, 2 * BLK:3 * BLK], conv[:, 3 * BLK:4 * BLK]))

    # fc1: single K=256 matmul (rows 160:256 of w1 are zero) + bias + relu
    h = jnp.dot(pooled.astype(jnp.bfloat16), w1_ref[...],
                preferred_element_type=jnp.float32) + b1_ref[...]
    h = jnp.maximum(h, 0.0)                           # (tb, 100) f32

    # fused heads: lanes 0..39 = policy logits, lane 40 = value, rest zero
    comb = jnp.dot(h.astype(jnp.bfloat16), wh_ref[...],
                   preferred_element_type=jnp.float32) + bh_ref[...]

    lane = lax.broadcasted_iota(jnp.int32, comb.shape, 1)
    is_pol = lane < LAYER2
    logits = jnp.where(is_pol, comb, jnp.float32(-1e30))
    m = jnp.max(logits, axis=1, keepdims=True)
    e = jnp.where(is_pol, jnp.exp(logits - m), 0.0)
    inv = pl.reciprocal(jnp.sum(e, axis=1, keepdims=True), approx=True)
    # lane-dense (tb, 128) store: softmax in policy lanes, raw value elsewhere
    out_ref[...] = jnp.where(is_pol, e * inv, comb)


def init_params(key):
    ks = jax.random.split(key, 8)
    kk = IN_CHANNELS * KERNEL_SIZE * KERNEL_SIZE

    def u(k, shape, fan_in):
        bound = 1.0 / math.sqrt(fan_in)
        return jax.random.uniform(k, shape, jnp.float32, -bound, bound)

    return dict(
        conv_w=u(ks[0], (OUT_CHANNELS, IN_CHANNELS, KERNEL_SIZE, KERNEL_SIZE), kk),
        conv_b=u(ks[1], (OUT_CHANNELS,), kk),
        fc1_w=u(ks[2], (LAYER1, P_SIZE), P_SIZE),
        fc1_b=u(ks[3], (LAYER1,), P_SIZE),
        fc2_w=u(ks[4], (LAYER2, LAYER1), LAYER1),
        fc2_b=u(ks[5], (LAYER2,), LAYER1),
        fc_w=u(ks[6], (1, LAYER1), LAYER1),
        fc_b=u(ks[7], (1,), LAYER1),
    )


def _conv_as_dense(conv_w):
    """Fold the padded 3x3 conv into a dense (160, 4*BLK) weight.

    Row i = flat input index (c_in, h, w); columns ordered
    (pool_dh, pool_dw, [c_out, ph, pw] zero-padded to BLK)."""
    eye = jnp.eye(N_IN, dtype=jnp.float32).reshape(N_IN, IN_CHANNELS, H, W)
    y = lax.conv_general_dilated(eye, conv_w, (1, 1), ((1, 1), (1, 1)),
                                 dimension_numbers=('NCHW', 'OIHW', 'NCHW'))
    # (N_IN, c, hh, ww) -> (N_IN, c, ph, dh, pw, dw) -> (N_IN, dh, dw, c, ph, pw)
    y = y.reshape(N_IN, OUT_CHANNELS, PH, 2, PW, 2)
    y = jnp.transpose(y, (0, 3, 5, 1, 2, 4)).reshape(N_IN, 4, P_SIZE)
    y = jnp.pad(y, ((0, 0), (0, 0), (0, BLK - P_SIZE)))
    return y.reshape(N_IN, 4 * BLK)


def prepare_kernel_params(params):
    """One-time weight prep (conv folding, head fusion, bf16 cast)."""
    wc = _conv_as_dense(params['conv_w']).astype(jnp.bfloat16)
    bc = jnp.broadcast_to(params['conv_b'][None, None, :, None, None],
                          (2, 2, OUT_CHANNELS, PH, PW)).reshape(1, 4, P_SIZE)
    bc = jnp.pad(bc, ((0, 0), (0, 0), (0, BLK - P_SIZE)))
    bc = bc.reshape(1, 4 * BLK).astype(jnp.float32)

    w1 = jnp.pad(params['fc1_w'].T, ((0, BLK - P_SIZE), (0, 0))).astype(jnp.bfloat16)
    b1 = params['fc1_b'].reshape(1, LAYER1).astype(jnp.float32)

    wh = jnp.concatenate([params['fc2_w'].T, params['fc_w'].T], axis=1)   # (100, 41)
    wh = jnp.pad(wh, ((0, 0), (0, OUT_LANES - (LAYER2 + 1)))).astype(jnp.bfloat16)
    bh = jnp.concatenate([params['fc2_b'], params['fc_b']])
    bh = jnp.pad(bh, (0, OUT_LANES - (LAYER2 + 1))).reshape(1, OUT_LANES)
    bh = bh.astype(jnp.float32)
    return dict(wc=wc, bc=bc, w1=w1, b1=b1, wh=wh, bh=bh)


def _round_up(a, b):
    return ((a + b - 1) // b) * b


@jax.jit
def net_forward(x, kp):
    x = x.reshape(-1, IN_CHANNELS, H, W).astype(jnp.float32)
    n = x.shape[0]
    n16 = _round_up(max(n, 1), 16)          # bf16 sublane-friendly padding
    tb = min(TB_MAX, n16)                   # batch tile per grid step
    n_pad = _round_up(n16, tb)
    xf = jnp.pad(x.reshape(n, N_IN), ((0, n_pad - n), (0, 0))).astype(jnp.bfloat16)

    out = pl.pallas_call(
        _net_kernel,
        out_shape=jax.ShapeDtypeStruct((n_pad, OUT_LANES), jnp.float32),
        grid=(n_pad // tb,),
        in_specs=[
            pl.BlockSpec((tb, N_IN), lambda i: (i, 0)),          # streamed x tile
            pl.BlockSpec((N_IN, 4 * BLK), lambda i: (0, 0)),     # resident weights
            pl.BlockSpec((1, 4 * BLK), lambda i: (0, 0)),
            pl.BlockSpec((BLK, LAYER1), lambda i: (0, 0)),
            pl.BlockSpec((1, LAYER1), lambda i: (0, 0)),
            pl.BlockSpec((LAYER1, OUT_LANES), lambda i: (0, 0)),
            pl.BlockSpec((1, OUT_LANES), lambda i: (0, 0)),
        ],
        out_specs=pl.BlockSpec((tb, OUT_LANES), lambda i: (i, 0)),
        compiler_params=pltpu.CompilerParams(
            dimension_semantics=("parallel",)),   # v7x: shard tiles over both TCs
    )(xf, kp['wc'], kp['bc'], kp['w1'], kp['b1'], kp['wh'], kp['bh'])

    policy = out[:n, :LAYER2]
    value = out[:n, LAYER2:LAYER2 + 1]
    return policy, value


def reference_forward(x, params):
    # pure-JAX f32 reference mirroring the PyTorch forward
    x = x.reshape(-1, IN_CHANNELS, H, W).astype(jnp.float32)
    n = x.shape[0]
    y = lax.conv_general_dilated(x, params['conv_w'], (1, 1),
                                 ((1, 1), (1, 1)),
                                 dimension_numbers=('NCHW', 'OIHW', 'NCHW'))
    y = y + params['conv_b'][None, :, None, None]
    y = jnp.maximum(y, 0.0)
    y = y.reshape(n, OUT_CHANNELS, PH, 2, PW, 2).max(axis=(3, 5))
    flat = y.reshape(n, P_SIZE)
    h = jnp.maximum(flat @ params['fc1_w'].T + params['fc1_b'], 0.0)
    value = h @ params['fc_w'].T + params['fc_b']
    logits = h @ params['fc2_w'].T + params['fc2_b']
    policy = jax.nn.softmax(logits, axis=1)
    return policy, value


if __name__ == "__main__":
    key = jax.random.PRNGKey(0)
    pkey, xkey = jax.random.split(key)
    params = init_params(pkey)
    x = jax.random.normal(xkey, (2, IN_CHANNELS, H, W), jnp.float32)

    kp = prepare_kernel_params(params)
    policy, value = net_forward(x, kp)
    jax.block_until_ready((policy, value))

    ref_policy, ref_value = reference_forward(x, params)
    # tolerance sized for bf16 inputs/weights (matmul accumulation stays f32)
    assert np.allclose(np.asarray(policy), np.asarray(ref_policy),
                       atol=3e-2, rtol=3e-2), "policy mismatch"
    assert np.allclose(np.asarray(value), np.asarray(ref_value),
                       atol=3e-2, rtol=3e-2), "value mismatch"
    print("KERNEL_OK")
</pallas_src>

<mosaic_0001>
module attributes {stable_mosaic.version = 11 : i64} {
  func.func @_net_kernel(%arg0: i32, %arg1: memref<16x160xbf16, #tpu.memory_space<vmem>>, %arg2: memref<160x1024xbf16, #tpu.memory_space<vmem>>, %arg3: memref<1x1024xf32, #tpu.memory_space<vmem>>, %arg4: memref<256x100xbf16, #tpu.memory_space<vmem>>, %arg5: memref<1x100xf32, #tpu.memory_space<vmem>>, %arg6: memref<100x128xbf16, #tpu.memory_space<vmem>>, %arg7: memref<1x128xf32, #tpu.memory_space<vmem>>, %arg8: memref<16x128xf32, #tpu.memory_space<vmem>>) attributes {dimension_semantics = [#tpu.dimension_semantics<parallel>], iteration_bounds = array<i64: 1>, scalar_prefetch = 0 : i64, scratch_operands = 0 : i64, tpu.core_type = #tpu.core_type<tc>, window_params = [{transform_indices = @transform_0, window_bounds = array<i64: 16, 160>}, {pipeline_mode = #tpu.pipeline_mode<synchronous>, transform_indices = @transform_1, window_bounds = array<i64: 160, 1024>}, {pipeline_mode = #tpu.pipeline_mode<synchronous>, transform_indices = @transform_2, window_bounds = array<i64: 1, 1024>}, {pipeline_mode = #tpu.pipeline_mode<synchronous>, transform_indices = @transform_3, window_bounds = array<i64: 256, 100>}, {pipeline_mode = #tpu.pipeline_mode<synchronous>, transform_indices = @transform_4, window_bounds = array<i64: 1, 100>}, {pipeline_mode = #tpu.pipeline_mode<synchronous>, transform_indices = @transform_5, window_bounds = array<i64: 100, 128>}, {pipeline_mode = #tpu.pipeline_mode<synchronous>, transform_indices = @transform_6, window_bounds = array<i64: 1, 128>}, {transform_indices = @transform_7, window_bounds = array<i64: 16, 128>}]} {
    %c0 = arith.constant 0 : index
    %c0_0 = arith.constant 0 : index
    %0 = vector.load %arg1[%c0, %c0_0] : memref<16x160xbf16, #tpu.memory_space<vmem>>, vector<16x160xbf16>
    %c0_1 = arith.constant 0 : index
    %c0_2 = arith.constant 0 : index
    %1 = vector.load %arg2[%c0_1, %c0_2] : memref<160x1024xbf16, #tpu.memory_space<vmem>>, vector<160x1024xbf16>
    %cst = arith.constant dense<0.000000e+00> : vector<16x1024xf32>
    %2 = tpu.matmul %0, %1, %cst {dimension_numbers = #tpu.dot_dimension_numbers<[1], [0], [0], [1], [0, 0, 1, 1], [], []>} : vector<16x160xbf16>, vector<160x1024xbf16>, vector<16x1024xf32> -> vector<16x1024xf32>
    %c0_3 = arith.constant 0 : index
    %c0_4 = arith.constant 0 : index
    %3 = vector.load %arg3[%c0_3, %c0_4] : memref<1x1024xf32, #tpu.memory_space<vmem>>, vector<1x1024xf32>
    %4 = vector.broadcast %3 : vector<1x1024xf32> to vector<16x1024xf32>
    %5 = arith.addf %2, %4 : vector<16x1024xf32>
    %cst_5 = arith.constant 0.000000e+00 : f32
    %6 = vector.broadcast %cst_5 : f32 to vector<16x1024xf32>
    %7 = arith.maximumf %5, %6 : vector<16x1024xf32>
    %8 = vector.extract_strided_slice %7 {offsets = [0, 0], sizes = [16, 256], strides = [1, 1]} : vector<16x1024xf32> to vector<16x256xf32>
    %9 = vector.extract_strided_slice %7 {offsets = [0, 256], sizes = [16, 256], strides = [1, 1]} : vector<16x1024xf32> to vector<16x256xf32>
    %10 = arith.maximumf %8, %9 : vector<16x256xf32>
    %11 = vector.extract_strided_slice %7 {offsets = [0, 512], sizes = [16, 256], strides = [1, 1]} : vector<16x1024xf32> to vector<16x256xf32>
    %12 = vector.extract_strided_slice %7 {offsets = [0, 768], sizes = [16, 256], strides = [1, 1]} : vector<16x1024xf32> to vector<16x256xf32>
    %13 = arith.maximumf %11, %12 : vector<16x256xf32>
    %14 = arith.maximumf %10, %13 : vector<16x256xf32>
    %15 = arith.truncf %14 : vector<16x256xf32> to vector<16x256xbf16>
    %c0_6 = arith.constant 0 : index
    %c0_7 = arith.constant 0 : index
    %16 = vector.load %arg4[%c0_6, %c0_7] : memref<256x100xbf16, #tpu.memory_space<vmem>>, vector<256x100xbf16>
    %cst_8 = arith.constant dense<0.000000e+00> : vector<16x100xf32>
    %17 = tpu.matmul %15, %16, %cst_8 {dimension_numbers = #tpu.dot_dimension_numbers<[1], [0], [0], [1], [0, 0, 1, 1], [], []>} : vector<16x256xbf16>, vector<256x100xbf16>, vector<16x100xf32> -> vector<16x100xf32>
    %c0_9 = arith.constant 0 : index
    %c0_10 = arith.constant 0 : index
    %18 = vector.load %arg5[%c0_9, %c0_10] : memref<1x100xf32, #tpu.memory_space<vmem>>, vector<1x100xf32>
    %19 = vector.broadcast %18 : vector<1x100xf32> to vector<16x100xf32>
    %20 = arith.addf %17, %19 : vector<16x100xf32>
    %cst_11 = arith.constant 0.000000e+00 : f32
    %21 = vector.broadcast %cst_11 : f32 to vector<16x100xf32>
    %22 = arith.maximumf %20, %21 : vector<16x100xf32>
    %23 = arith.truncf %22 : vector<16x100xf32> to vector<16x100xbf16>
    %c0_12 = arith.constant 0 : index
    %c0_13 = arith.constant 0 : index
    %24 = vector.load %arg6[%c0_12, %c0_13] : memref<100x128xbf16, #tpu.memory_space<vmem>>, vector<100x128xbf16>
    %cst_14 = arith.constant dense<0.000000e+00> : vector<16x128xf32>
    %25 = tpu.matmul %23, %24, %cst_14 {dimension_numbers = #tpu.dot_dimension_numbers<[1], [0], [0], [1], [0, 0, 1, 1], [], []>} : vector<16x100xbf16>, vector<100x128xbf16>, vector<16x128xf32> -> vector<16x128xf32>
    %c0_15 = arith.constant 0 : index
    %c0_16 = arith.constant 0 : index
    %26 = vector.load %arg7[%c0_15, %c0_16] : memref<1x128xf32, #tpu.memory_space<vmem>>, vector<1x128xf32>
    %27 = vector.broadcast %26 : vector<1x128xf32> to vector<16x128xf32>
    %28 = arith.addf %25, %27 : vector<16x128xf32>
    %29 = tpu.iota {dimensions = array<i32: 1>} : vector<16x128xi32>
    %c40_i32 = arith.constant 40 : i32
    %30 = vector.broadcast %c40_i32 : i32 to vector<16x128xi32>
    %31 = arith.cmpi slt, %29, %30 : vector<16x128xi32>
    %cst_17 = arith.constant -1.000000e+30 : f32
    %32 = vector.broadcast %cst_17 : f32 to vector<16x128xf32>
    %33 = arith.select %31, %28, %32 : vector<16x128xi1>, vector<16x128xf32>
    %cst_18 = arith.constant dense<0xFF800000> : vector<16xf32>
    %34 = vector.multi_reduction <maximumf>, %33, %cst_18 [1] : vector<16x128xf32> to vector<16xf32>
    %35 = vector.shape_cast %34 : vector<16xf32> to vector<16x1xf32>
    %36 = vector.broadcast %35 : vector<16x1xf32> to vector<16x128xf32>
    %37 = arith.subf %33, %36 : vector<16x128xf32>
    %38 = math.exp %37 : vector<16x128xf32>
    %cst_19 = arith.constant 0.000000e+00 : f32
    %39 = vector.broadcast %cst_19 : f32 to vector<16x128xf32>
    %40 = arith.select %31, %38, %39 : vector<16x128xi1>, vector<16x128xf32>
    %cst_20 = arith.constant dense<0.000000e+00> : vector<16xf32>
    %41 = vector.multi_reduction <add>, %40, %cst_20 [1] : vector<16x128xf32> to vector<16xf32>
    %42 = vector.shape_cast %41 : vector<16xf32> to vector<16x1xf32>
    %43 = tpu.reciprocal %42 {approx = true} : vector<16x1xf32> -> vector<16x1xf32>
    %44 = vector.broadcast %43 : vector<16x1xf32> to vector<16x128xf32>
    %45 = arith.mulf %40, %44 : vector<16x128xf32>
    %46 = arith.select %31, %45, %28 : vector<16x128xi1>, vector<16x128xf32>
    %c0_21 = arith.constant 0 : index
    %c0_22 = arith.constant 0 : index
    %47 = vector.load %arg8[%c0_21, %c0_22] : memref<16x128xf32, #tpu.memory_space<vmem>>, vector<16x128xf32>
    tpu.vector_store %arg8[%c0_21, %c0_22], %46 {strides = array<i32>} : memref<16x128xf32, #tpu.memory_space<vmem>>, vector<16x128xf32>,
    return
  }
  func.func @transform_0(%arg0: i32) -> (i32, i32) {
    %c0_i32 = arith.constant 0 : i32
    %c0_i32_0 = arith.constant 0 : i32
    return %arg0, %c0_i32 : i32, i32
  }
  func.func @transform_1(%arg0: i32) -> (i32, i32) {
    %c0_i32 = arith.constant 0 : i32
    %c0_i32_0 = arith.constant 0 : i32
    %c0_i32_1 = arith.constant 0 : i32
    return %c0_i32, %c0_i32_0 : i32, i32
  }
  func.func @transform_2(%arg0: i32) -> (i32, i32) {
    %c0_i32 = arith.constant 0 : i32
    %c0_i32_0 = arith.constant 0 : i32
    %c0_i32_1 = arith.constant 0 : i32
    return %c0_i32, %c0_i32_0 : i32, i32
  }
  func.func @transform_3(%arg0: i32) -> (i32, i32) {
    %c0_i32 = arith.constant 0 : i32
    %c0_i32_0 = arith.constant 0 : i32
    %c0_i32_1 = arith.constant 0 : i32
    return %c0_i32, %c0_i32_0 : i32, i32
  }
  func.func @transform_4(%arg0: i32) -> (i32, i32) {
    %c0_i32 = arith.constant 0 : i32
    %c0_i32_0 = arith.constant 0 : i32
    %c0_i32_1 = arith.constant 0 : i32
    return %c0_i32, %c0_i32_0 : i32, i32
  }
  func.func @transform_5(%arg0: i32) -> (i32, i32) {
    %c0_i32 = arith.constant 0 : i32
    %c0_i32_0 = arith.constant 0 : i32
    %c0_i32_1 = arith.constant 0 : i32
    return %c0_i32, %c0_i32_0 : i32, i32
  }
  func.func @transform_6(%arg0: i32) -> (i32, i32) {
    %c0_i32 = arith.constant 0 : i32
    %c0_i32_0 = arith.constant 0 : i32
    %c0_i32_1 = arith.constant 0 : i32
    return %c0_i32, %c0_i32_0 : i32, i32
  }
  func.func @transform_7(%arg0: i32) -> (i32, i32) {
    %c0_i32 = arith.constant 0 : i32
    %c0_i32_0 = arith.constant 0 : i32
    return %arg0, %c0_i32 : i32, i32
  }
}

</mosaic_0001>

<llo_original>
// kernel: net_forward.1
$region0: #{net_forward.1}
  #allocation0 [shape = 'u32[]', space=smem, size = 0x4, offset = 0x4, fixed_abs, tag = 'smem constant byte address 0x4 - core index']
  #allocation1 [shape = 'u32[72,128]{1,0:T(1,128)}', space=vmem, size = 0x9000, scoped, tag = 'internal scratch']
  %s0 = inlined_call_operand.vmem [shape: bf16[16,160], index: 0, kind: input, shape index: {}]
  %s1 = inlined_call_operand.hbm [shape: bf16[160,1024], index: 1, kind: input, shape index: {}]
  %s2 = inlined_call_operand.vmem [shape: f32[1,1024], index: 2, kind: input, shape index: {}]
  %s3 = inlined_call_operand.vmem [shape: bf16[256,100], index: 3, kind: input, shape index: {}]
  %s4 = inlined_call_operand.vmem [shape: f32[1,100], index: 4, kind: input, shape index: {}]
  %s5 = inlined_call_operand.vmem [shape: bf16[100,128], index: 5, kind: input, shape index: {}]
  %s6 = inlined_call_operand.vmem [shape: f32[1,128], index: 6, kind: input, shape index: {}]
  %s7 = inlined_call_operand.vmem [shape: f32[16,128], index: 7, kind: output, shape index: {}]
  %s8 = sld [smem:[#allocation0]]
  $region42: #{net_forward.1} parent=0
    _
  %s10 = ssub.s32 1, %s8
  %s11 = scalar_select 0, %s10, %s8
  $region1: #{net_forward.1} parent=0
    #allocation2 [shape = 'u8[327680]{0}', space=vmem, size = 0x50000, scoped, tag = 'input window, operand 1, single buffered']
    #allocation3 [shape = 's32[1]{0}', space=sflag, size = 0x4, scoped, tag = 'scoped memory for net_forward.1']
    %12 = vsyncpa [#allocation3], 0
    // Predicated region
    $region2: #{net_forward.1} parent=1 // pred_check
      _
    $region3: #{net_forward.1} parent=1 // pred_check_branch
      %14 = sbr.rel (0) target = $region5
    $region4: #{net_forward.1} parent=1 // pred_region
      _
    $region5: #{net_forward.1} parent=1 // pred_fallthru
      _
    // Predicated region
    $region6: #{net_forward.1} parent=1 // pred_check
      _
    $region7: #{net_forward.1} parent=1 // pred_check_branch
      %16 = sbr.rel (0) target = $region9
    $region8: #{net_forward.1} parent=1 // pred_region
      %18 = vsyncadd [#allocation3], 0
      %s19 = sshll.u32 %s1, 4
      %s20 = int_to_ptr.hbm [resolvable:$true] %s19
      %s21 = sshll.u32 [#allocation2], 4
      %s22 = int_to_ptr.vmem [resolvable:$true] %s21
      %27 = dma.hbm_to_vmem [thread:$0]  %s20, 10240, %s22, [#allocation3], 512, 512, 32
    $region9: #{net_forward.1} parent=1 // pred_fallthru
      _
    // Predicated region
    $region10: #{net_forward.1} parent=1 // pred_check
      _
    $region11: #{net_forward.1} parent=1 // pred_check_branch
      %29 = sbr.rel (0) target = $region13
    $region12: #{net_forward.1} parent=1 // pred_region
      _
    $region13: #{net_forward.1} parent=1 // pred_fallthru
      _
    // Predicated region
    $region14: #{net_forward.1} parent=1 // pred_check
      _
    $region15: #{net_forward.1} parent=1 // pred_check_branch
      %31 = sbr.rel (0) target = $region17
    $region16: #{net_forward.1} parent=1 // pred_region
      _
    $region17: #{net_forward.1} parent=1 // pred_fallthru
      _
    // Predicated region
    $region18: #{net_forward.1} parent=1 // pred_check
      _
    $region19: #{net_forward.1} parent=1 // pred_check_branch
      %33 = sbr.rel (0) target = $region21
    $region20: #{net_forward.1} parent=1 // pred_region
      _
    $region21: #{net_forward.1} parent=1 // pred_fallthru
      _
    // Predicated region
    $region22: #{net_forward.1} parent=1 // pred_check
      _
    $region23: #{net_forward.1} parent=1 // pred_check_branch
      %35 = sbr.rel (0) target = $region25
    $region24: #{net_forward.1} parent=1 // pred_region
      _
    $region25: #{net_forward.1} parent=1 // pred_fallthru
      _
    // Predicated region
    $region26: #{net_forward.1} parent=1 // pred_check
      _
    $region27: #{net_forward.1} parent=1 // pred_check_branch
      %37 = sbr.rel (0) target = $region29
    $region28: #{net_forward.1} parent=1 // pred_region
      _
    $region29: #{net_forward.1} parent=1 // pred_fallthru
      _
    // Predicated region
    $region30: #{net_forward.1} parent=1 // pred_check
      _
    $region31: #{net_forward.1} parent=1 // pred_check_branch
      %39 = sbr.rel (0) target = $region33
    $region32: #{net_forward.1} parent=1 // pred_region
      %41 = dma.done [#allocation3], 10240
    $region33: #{net_forward.1} parent=1 // pred_fallthru
      _
    %v43 = vld [vmem:[%s0] sm:$0xff]
    %v44 = vld [vmem:[%s0 + $0x8] sm:$0xff]
    %v45 = vld [vmem:[#allocation2] sm:$0xff]
    %v46 = vld [vmem:[#allocation2 + $0x8] sm:$0xff]
    %v47 = vld [vmem:[#allocation2 + $0x10] sm:$0xff]
    %v48 = vld [vmem:[#allocation2 + $0x18] sm:$0xff]
    %v49 = vld [vmem:[#allocation2 + $0x20] sm:$0xff]
    %v50 = vld [vmem:[#allocation2 + $0x28] sm:$0xff]
    %v51 = vld [vmem:[#allocation2 + $0x30] sm:$0xff]
    %v52 = vld [vmem:[#allocation2 + $0x38] sm:$0xff]
    %v53 = vld [vmem:[#allocation2 + $0x40] sm:$0xff]
    %v54 = vld [vmem:[#allocation2 + $0x48] sm:$0xff]
    %v55 = vld [vmem:[#allocation2 + $0x50] sm:$0xff]
    %v56 = vld [vmem:[#allocation2 + $0x58] sm:$0xff]
    %v57 = vld [vmem:[#allocation2 + $0x60] sm:$0xff]
    %v58 = vld [vmem:[#allocation2 + $0x68] sm:$0xff]
    %v59 = vld [vmem:[#allocation2 + $0x70] sm:$0xff]
    %v60 = vld [vmem:[#allocation2 + $0x78] sm:$0xff]
    %v61 = vld [vmem:[#allocation2 + $0x80] sm:$0xff]
    %v62 = vld [vmem:[#allocation2 + $0x88] sm:$0xff]
    %v63 = vld [vmem:[#allocation2 + $0x90] sm:$0xff]
    %v64 = vld [vmem:[#allocation2 + $0x98] sm:$0xff]
    %v65 = vld [vmem:[#allocation2 + $0xa0] sm:$0xff]
    %v66 = vld [vmem:[#allocation2 + $0xa8] sm:$0xff]
    %v67 = vld [vmem:[#allocation2 + $0xb0] sm:$0xff]
    %v68 = vld [vmem:[#allocation2 + $0xb8] sm:$0xff]
    %v69 = vld [vmem:[#allocation2 + $0xc0] sm:$0xff]
    %v70 = vld [vmem:[#allocation2 + $0xc8] sm:$0xff]
    %v71 = vld [vmem:[#allocation2 + $0xd0] sm:$0xff]
    %v72 = vld [vmem:[#allocation2 + $0xd8] sm:$0xff]
    %v73 = vld [vmem:[#allocation2 + $0xe0] sm:$0xff]
    %v74 = vld [vmem:[#allocation2 + $0xe8] sm:$0xff]
    %v75 = vld [vmem:[#allocation2 + $0xf0] sm:$0xff]
    %v76 = vld [vmem:[#allocation2 + $0xf8] sm:$0xff]
    %v77 = vld [vmem:[#allocation2 + $0x100] sm:$0xff]
    %v78 = vld [vmem:[#allocation2 + $0x108] sm:$0xff]
    %v79 = vld [vmem:[#allocation2 + $0x110] sm:$0xff]
    %v80 = vld [vmem:[#allocation2 + $0x118] sm:$0xff]
    %v81 = vld [vmem:[#allocation2 + $0x120] sm:$0xff]
    %v82 = vld [vmem:[#allocation2 + $0x128] sm:$0xff]
    %v83 = vld [vmem:[#allocation2 + $0x130] sm:$0xff]
    %v84 = vld [vmem:[#allocation2 + $0x138] sm:$0xff]
    %v85 = vld [vmem:[#allocation2 + $0x140] sm:$0xff]
    %v86 = vld [vmem:[#allocation2 + $0x148] sm:$0xff]
    %v87 = vld [vmem:[#allocation2 + $0x150] sm:$0xff]
    %v88 = vld [vmem:[#allocation2 + $0x158] sm:$0xff]
    %v89 = vld [vmem:[#allocation2 + $0x160] sm:$0xff]
    %v90 = vld [vmem:[#allocation2 + $0x168] sm:$0xff]
    %v91 = vld [vmem:[#allocation2 + $0x170] sm:$0xff]
    %v92 = vld [vmem:[#allocation2 + $0x178] sm:$0xff]
    %v93 = vld [vmem:[#allocation2 + $0x180] sm:$0xff]
    %v94 = vld [vmem:[#allocation2 + $0x188] sm:$0xff]
    %v95 = vld [vmem:[#allocation2 + $0x190] sm:$0xff]
    %v96 = vld [vmem:[#allocation2 + $0x198] sm:$0xff]
    %v97 = vld [vmem:[#allocation2 + $0x1a0] sm:$0xff]
    %v98 = vld [vmem:[#allocation2 + $0x1a8] sm:$0xff]
    %v99 = vld [vmem:[#allocation2 + $0x1b0] sm:$0xff]
    %v100 = vld [vmem:[#allocation2 + $0x1b8] sm:$0xff]
    %v101 = vld [vmem:[#allocation2 + $0x1c0] sm:$0xff]
    %v102 = vld [vmem:[#allocation2 + $0x1c8] sm:$0xff]
    %v103 = vld [vmem:[#allocation2 + $0x1d0] sm:$0xff]
    %v104 = vld [vmem:[#allocation2 + $0x1d8] sm:$0xff]
    %v105 = vld [vmem:[#allocation2 + $0x1e0] sm:$0xff]
    %v106 = vld [vmem:[#allocation2 + $0x1e8] sm:$0xff]
    %v107 = vld [vmem:[#allocation2 + $0x1f0] sm:$0xff]
    %v108 = vld [vmem:[#allocation2 + $0x1f8] sm:$0xff]
    %v109 = vld [vmem:[#allocation2 + $0x200] sm:$0xff]
    %v110 = vld [vmem:[#allocation2 + $0x208] sm:$0xff]
    %v111 = vld [vmem:[#allocation2 + $0x210] sm:$0xff]
    %v112 = vld [vmem:[#allocation2 + $0x218] sm:$0xff]
    %v113 = vld [vmem:[#allocation2 + $0x220] sm:$0xff]
    %v114 = vld [vmem:[#allocation2 + $0x228] sm:$0xff]
    %v115 = vld [vmem:[#allocation2 + $0x230] sm:$0xff]
    %v116 = vld [vmem:[#allocation2 + $0x238] sm:$0xff]
    %v117 = vld [vmem:[#allocation2 + $0x240] sm:$0xff]
    %v118 = vld [vmem:[#allocation2 + $0x248] sm:$0xff]
    %v119 = vld [vmem:[#allocation2 + $0x250] sm:$0xff]
    %v120 = vld [vmem:[#allocation2 + $0x258] sm:$0xff]
    %v121 = vld [vmem:[#allocation2 + $0x260] sm:$0xff]
    %v122 = vld [vmem:[#allocation2 + $0x268] sm:$0xff]
    %v123 = vld [vmem:[#allocation2 + $0x270] sm:$0xff]
    %v124 = vld [vmem:[#allocation2 + $0x278] sm:$0xff]
    %v125 = vld [vmem:[%s2] sm:$0xff]
    %v127 = vperm.slane %v125, 0
    %v128 = vperm.slane %v125, 1
    %v129 = vperm.slane %v125, 2
    %v130 = vperm.slane %v125, 3
    %v131 = vperm.slane %v125, 4
    %v132 = vperm.slane %v125, 5
    %v133 = vperm.slane %v125, 6
    %v134 = vperm.slane %v125, 7
    %v145 = vunpack.c.l.b16 %v43
    %v146 = vunpack.c.h.b16 %v43
    %v147 = vunpack.c.l.b16 %v44
    %v148 = vunpack.c.h.b16 %v44
    %v149 = vpack.c.b16 %v147, %v145
    %v150 = vpack.c.b16 %v148, %v146
    %v232 = vunpack.c.l.b16 %v45
    %v233 = vunpack.c.h.b16 %v45
    %v234 = vunpack.c.l.b16 %v46
    %v235 = vunpack.c.h.b16 %v46
    %v236 = vunpack.c.l.b16 %v47
    %v237 = vunpack.c.h.b16 %v47
    %v238 = vunpack.c.l.b16 %v48
    %v239 = vunpack.c.h.b16 %v48
    %v240 = vunpack.c.l.b16 %v49
    %v241 = vunpack.c.h.b16 %v49
    %v242 = vunpack.c.l.b16 %v50
    %v243 = vunpack.c.h.b16 %v50
    %v244 = vunpack.c.l.b16 %v51
    %v245 = vunpack.c.h.b16 %v51
    %v246 = vunpack.c.l.b16 %v52
    %v247 = vunpack.c.h.b16 %v52
    %v248 = vunpack.c.l.b16 %v53
    %v249 = vunpack.c.h.b16 %v53
    %v250 = vunpack.c.l.b16 %v54
    %v251 = vunpack.c.h.b16 %v54
    %v252 = vunpack.c.l.b16 %v55
    %v253 = vunpack.c.h.b16 %v55
    %v254 = vunpack.c.l.b16 %v56
    %v255 = vunpack.c.h.b16 %v56
    %v256 = vunpack.c.l.b16 %v57
    %v257 = vunpack.c.h.b16 %v57
    %v258 = vunpack.c.l.b16 %v58
    %v259 = vunpack.c.h.b16 %v58
    %v260 = vunpack.c.l.b16 %v59
    %v261 = vunpack.c.h.b16 %v59
    %v262 = vunpack.c.l.b16 %v60
    %v263 = vunpack.c.h.b16 %v60
    %v264 = vunpack.c.l.b16 %v61
    %v265 = vunpack.c.h.b16 %v61
    %v266 = vunpack.c.l.b16 %v62
    %v267 = vunpack.c.h.b16 %v62
    %v268 = vunpack.c.l.b16 %v63
    %v269 = vunpack.c.h.b16 %v63
    %v270 = vunpack.c.l.b16 %v64
    %v271 = vunpack.c.h.b16 %v64
    %v272 = vunpack.c.l.b16 %v65
    %v273 = vunpack.c.h.b16 %v65
    %v274 = vunpack.c.l.b16 %v66
    %v275 = vunpack.c.h.b16 %v66
    %v276 = vunpack.c.l.b16 %v67
    %v277 = vunpack.c.h.b16 %v67
    %v278 = vunpack.c.l.b16 %v68
    %v279 = vunpack.c.h.b16 %v68
    %v280 = vunpack.c.l.b16 %v69
    %v281 = vunpack.c.h.b16 %v69
    %v282 = vunpack.c.l.b16 %v70
    %v283 = vunpack.c.h.b16 %v70
    %v284 = vunpack.c.l.b16 %v71
    %v285 = vunpack.c.h.b16 %v71
    %v286 = vunpack.c.l.b16 %v72
    %v287 = vunpack.c.h.b16 %v72
    %v288 = vunpack.c.l.b16 %v73
    %v289 = vunpack.c.h.b16 %v73
    %v290 = vunpack.c.l.b16 %v74
    %v291 = vunpack.c.h.b16 %v74
    %v292 = vunpack.c.l.b16 %v75
    %v293 = vunpack.c.h.b16 %v75
    %v294 = vunpack.c.l.b16 %v76
    %v295 = vunpack.c.h.b16 %v76
    %v296 = vunpack.c.l.b16 %v77
    %v297 = vunpack.c.h.b16 %v77
    %v298 = vunpack.c.l.b16 %v78
    %v299 = vunpack.c.h.b16 %v78
    %v300 = vunpack.c.l.b16 %v79
    %v301 = vunpack.c.h.b16 %v79
    %v302 = vunpack.c.l.b16 %v80
    %v303 = vunpack.c.h.b16 %v80
    %v304 = vunpack.c.l.b16 %v81
    %v305 = vunpack.c.h.b16 %v81
    %v306 = vunpack.c.l.b16 %v82
    %v307 = vunpack.c.h.b16 %v82
    %v308 = vunpack.c.l.b16 %v83
    %v309 = vunpack.c.h.b16 %v83
    %v310 = vunpack.c.l.b16 %v84
    %v311 = vunpack.c.h.b16 %v84
    %v312 = vunpack.c.l.b16 %v85
    %v313 = vunpack.c.h.b16 %v85
    %v314 = vunpack.c.l.b16 %v86
    %v315 = vunpack.c.h.b16 %v86
    %v316 = vunpack.c.l.b16 %v87
    %v317 = vunpack.c.h.b16 %v87
    %v318 = vunpack.c.l.b16 %v88
    %v319 = vunpack.c.h.b16 %v88
    %v320 = vunpack.c.l.b16 %v89
    %v321 = vunpack.c.h.b16 %v89
    %v322 = vunpack.c.l.b16 %v90
    %v323 = vunpack.c.h.b16 %v90
    %v324 = vunpack.c.l.b16 %v91
    %v325 = vunpack.c.h.b16 %v91
    %v326 = vunpack.c.l.b16 %v92
    %v327 = vunpack.c.h.b16 %v92
    %v328 = vunpack.c.l.b16 %v93
    %v329 = vunpack.c.h.b16 %v93
    %v330 = vunpack.c.l.b16 %v94
    %v331 = vunpack.c.h.b16 %v94
    %v332 = vunpack.c.l.b16 %v95
    %v333 = vunpack.c.h.b16 %v95
    %v334 = vunpack.c.l.b16 %v96
    %v335 = vunpack.c.h.b16 %v96
    %v336 = vunpack.c.l.b16 %v97
    %v337 = vunpack.c.h.b16 %v97
    %v338 = vunpack.c.l.b16 %v98
    %v339 = vunpack.c.h.b16 %v98
    %v340 = vunpack.c.l.b16 %v99
    %v341 = vunpack.c.h.b16 %v99
    %v342 = vunpack.c.l.b16 %v100
    %v343 = vunpack.c.h.b16 %v100
    %v344 = vunpack.c.l.b16 %v101
    %v345 = vunpack.c.h.b16 %v101
    %v346 = vunpack.c.l.b16 %v102
    %v347 = vunpack.c.h.b16 %v102
    %v348 = vunpack.c.l.b16 %v103
    %v349 = vunpack.c.h.b16 %v103
    %v350 = vunpack.c.l.b16 %v104
    %v351 = vunpack.c.h.b16 %v104
    %v352 = vunpack.c.l.b16 %v105
    %v353 = vunpack.c.h.b16 %v105
    %v354 = vunpack.c.l.b16 %v106
    %v355 = vunpack.c.h.b16 %v106
    %v356 = vunpack.c.l.b16 %v107
    %v357 = vunpack.c.h.b16 %v107
    %v358 = vunpack.c.l.b16 %v108
    %v359 = vunpack.c.h.b16 %v108
    %v360 = vunpack.c.l.b16 %v109
    %v361 = vunpack.c.h.b16 %v109
    %v362 = vunpack.c.l.b16 %v110
    %v363 = vunpack.c.h.b16 %v110
    %v364 = vunpack.c.l.b16 %v111
    %v365 = vunpack.c.h.b16 %v111
    %v366 = vunpack.c.l.b16 %v112
    %v367 = vunpack.c.h.b16 %v112
    %v368 = vunpack.c.l.b16 %v113
    %v369 = vunpack.c.h.b16 %v113
    %v370 = vunpack.c.l.b16 %v114
    %v371 = vunpack.c.h.b16 %v114
    %v372 = vunpack.c.l.b16 %v115
    %v373 = vunpack.c.h.b16 %v115
    %v374 = vunpack.c.l.b16 %v116
    %v375 = vunpack.c.h.b16 %v116
    %v376 = vunpack.c.l.b16 %v117
    %v377 = vunpack.c.h.b16 %v117
    %v378 = vunpack.c.l.b16 %v118
    %v379 = vunpack.c.h.b16 %v118
    %v380 = vunpack.c.l.b16 %v119
    %v381 = vunpack.c.h.b16 %v119
    %v382 = vunpack.c.l.b16 %v120
    %v383 = vunpack.c.h.b16 %v120
    %v384 = vunpack.c.l.b16 %v121
    %v385 = vunpack.c.h.b16 %v121
    %v386 = vunpack.c.l.b16 %v122
    %v387 = vunpack.c.h.b16 %v122
    %v388 = vunpack.c.l.b16 %v123
    %v389 = vunpack.c.h.b16 %v123
    %v390 = vunpack.c.l.b16 %v124
    %v391 = vunpack.c.h.b16 %v124
    %v392 = vpack.c.b16 %v240, %v232
    %v393 = vpack.c.b16 %v241, %v233
    %v394 = vpack.c.b16 %v242, %v234
    %v395 = vpack.c.b16 %v243, %v235
    %v396 = vpack.c.b16 %v244, %v236
    %v397 = vpack.c.b16 %v245, %v237
    %v398 = vpack.c.b16 %v246, %v238
    %v399 = vpack.c.b16 %v247, %v239
    %v400 = vpack.c.b16 %v256, %v248
    %v401 = vpack.c.b16 %v257, %v249
    %v402 = vpack.c.b16 %v258, %v250
    %v403 = vpack.c.b16 %v259, %v251
    %v404 = vpack.c.b16 %v260, %v252
    %v405 = vpack.c.b16 %v261, %v253
    %v406 = vpack.c.b16 %v262, %v254
    %v407 = vpack.c.b16 %v263, %v255
    %v408 = vpack.c.b16 %v272, %v264
    %v409 = vpack.c.b16 %v273, %v265
    %v410 = vpack.c.b16 %v274, %v266
    %v411 = vpack.c.b16 %v275, %v267
    %v412 = vpack.c.b16 %v276, %v268
    %v413 = vpack.c.b16 %v277, %v269
    %v414 = vpack.c.b16 %v278, %v270
    %v415 = vpack.c.b16 %v279, %v271
    %v416 = vpack.c.b16 %v288, %v280
    %v417 = vpack.c.b16 %v289, %v281
    %v418 = vpack.c.b16 %v290, %v282
    %v419 = vpack.c.b16 %v291, %v283
    %v420 = vpack.c.b16 %v292, %v284
    %v421 = vpack.c.b16 %v293, %v285
    %v422 = vpack.c.b16 %v294, %v286
    %v423 = vpack.c.b16 %v295, %v287
    %v424 = vpack.c.b16 %v304, %v296
    %v425 = vpack.c.b16 %v305, %v297
    %v426 = vpack.c.b16 %v306, %v298
    %v427 = vpack.c.b16 %v307, %v299
    %v428 = vpack.c.b16 %v308, %v300
    %v429 = vpack.c.b16 %v309, %v301
    %v430 = vpack.c.b16 %v310, %v302
    %v431 = vpack.c.b16 %v311, %v303
    %v432 = vpack.c.b16 %v320, %v312
    %v433 = vpack.c.b16 %v321, %v313
    %v434 = vpack.c.b16 %v322, %v314
    %v435 = vpack.c.b16 %v323, %v315
    %v436 = vpack.c.b16 %v324, %v316
    %v437 = vpack.c.b16 %v325, %v317
    %v438 = vpack.c.b16 %v326, %v318
    %v439 = vpack.c.b16 %v327, %v319
    %v440 = vpack.c.b16 %v336, %v328
    %v441 = vpack.c.b16 %v337, %v329
    %v442 = vpack.c.b16 %v338, %v330
    %v443 = vpack.c.b16 %v339, %v331
    %v444 = vpack.c.b16 %v340, %v332
    %v445 = vpack.c.b16 %v341, %v333
    %v446 = vpack.c.b16 %v342, %v334
    %v447 = vpack.c.b16 %v343, %v335
    %v448 = vpack.c.b16 %v352, %v344
    %v449 = vpack.c.b16 %v353, %v345
    %v450 = vpack.c.b16 %v354, %v346
    %v451 = vpack.c.b16 %v355, %v347
    %v452 = vpack.c.b16 %v356, %v348
    %v453 = vpack.c.b16 %v357, %v349
    %v454 = vpack.c.b16 %v358, %v350
    %v455 = vpack.c.b16 %v359, %v351
    %v456 = vpack.c.b16 %v368, %v360
    %v457 = vpack.c.b16 %v369, %v361
    %v458 = vpack.c.b16 %v370, %v362
    %v459 = vpack.c.b16 %v371, %v363
    %v460 = vpack.c.b16 %v372, %v364
    %v461 = vpack.c.b16 %v373, %v365
    %v462 = vpack.c.b16 %v374, %v366
    %v463 = vpack.c.b16 %v375, %v367
    %v464 = vpack.c.b16 %v384, %v376
    %v465 = vpack.c.b16 %v385, %v377
    %v466 = vpack.c.b16 %v386, %v378
    %v467 = vpack.c.b16 %v387, %v379
    %v468 = vpack.c.b16 %v388, %v380
    %v469 = vpack.c.b16 %v389, %v381
    %v470 = vpack.c.b16 %v390, %v382
    %v471 = vpack.c.b16 %v391, %v383
    %vm552 = vcmask 261120
    %v554 = vsel %vm552, %v150, 0
    %556 = vmatpush.bf16.msra.mxu0 %v448
    %557 = vmatpush.bf16.msra.mxu0 %v440
    %558 = vmatpush.bf16.msra.mxu0 %v432
    %559 = vmatpush.bf16.msra.mxu0 %v424
    %560 = vmatpush.bf16.msra.mxu0 %v416
    %561 = vmatpush.bf16.msra.mxu0 %v408
    %562 = vmatpush.bf16.msra.mxu0 %v400
    %563 = vmatpush.bf16.msra.mxu0 %v392
    %564 = vmatmul.bf16.gmra.mxu0 %v149
    %v565 = vpop.f32.mrf.mxu0
    %v566 = vadd.f32 %v127, %v565
    %v567 = vpop.f32.mrf.mxu0
    %v568 = vadd.f32 %v127, %v567
    %569 = vdwg.mxu0
    %570 = vmatpush.bf16.msra.mxu0 0
    %571 = vmatpush.bf16.msra.mxu0 0
    %572 = vmatpush.bf16.msra.mxu0 0
    %573 = vmatpush.bf16.msra.mxu0 0
    %574 = vmatpush.bf16.msra.mxu0 0
    %575 = vmatpush.bf16.msra.mxu0 0
    %576 = vmatpush.bf16.msra.mxu0 %v464
    %577 = vmatpush.bf16.msra.mxu0 %v456
    %578 = vmatmul.bf16.gmra.mxu0 %v554
    %v579 = vpop.f32.mrf.mxu0
    %v580 = vadd.f32 %v566, %v579
    %v581 = vpop.f32.mrf.mxu0
    %v582 = vadd.f32 %v568, %v581
    %583 = vdwg.mxu0
    %584 = vmatpush.bf16.msra.mxu0 %v449
    %585 = vmatpush.bf16.msra.mxu0 %v441
    %586 = vmatpush.bf16.msra.mxu0 %v433
    %587 = vmatpush.bf16.msra.mxu0 %v425
    %588 = vmatpush.bf16.msra.mxu0 %v417
    %589 = vmatpush.bf16.msra.mxu0 %v409
    %590 = vmatpush.bf16.msra.mxu0 %v401
    %591 = vmatpush.bf16.msra.mxu0 %v393
    %592 = vmatmul.bf16.gmra.mxu0 %v149
    %v593 = vpop.f32.mrf.mxu0
    %v594 = vadd.f32 %v128, %v593
    %v595 = vpop.f32.mrf.mxu0
    %v596 = vadd.f32 %v128, %v595
    %597 = vdwg.mxu0
    %598 = vmatpush.bf16.msra.mxu0 0
    %599 = vmatpush.bf16.msra.mxu0 0
    %600 = vmatpush.bf16.msra.mxu0 0
    %601 = vmatpush.bf16.msra.mxu0 0
    %602 = vmatpush.bf16.msra.mxu0 0
    %603 = vmatpush.bf16.msra.mxu0 0
    %604 = vmatpush.bf16.msra.mxu0 %v465
    %605 = vmatpush.bf16.msra.mxu0 %v457
    %606 = vmatmul.bf16.gmra.mxu0 %v554
    %v607 = vpop.f32.mrf.mxu0
    %v608 = vadd.f32 %v594, %v607
    %v609 = vpop.f32.mrf.mxu0
    %v610 = vadd.f32 %v596, %v609
    %611 = vdwg.mxu0
    %612 = vmatpush.bf16.msra.mxu0 %v450
    %613 = vmatpush.bf16.msra.mxu0 %v442
    %614 = vmatpush.bf16.msra.mxu0 %v434
    %615 = vmatpush.bf16.msra.mxu0 %v426
    %616 = vmatpush.bf16.msra.mxu0 %v418
    %617 = vmatpush.bf16.msra.mxu0 %v410
    %618 = vmatpush.bf16.msra.mxu0 %v402
    %619 = vmatpush.bf16.msra.mxu0 %v394
    %620 = vmatmul.bf16.gmra.mxu0 %v149
    %v621 = vpop.f32.mrf.mxu0
    %v622 = vadd.f32 %v129, %v621
    %v623 = vpop.f32.mrf.mxu0
    %v624 = vadd.f32 %v129, %v623
    %625 = vdwg.mxu0
    %626 = vmatpush.bf16.msra.mxu0 0
    %627 = vmatpush.bf16.msra.mxu0 0
    %628 = vmatpush.bf16.msra.mxu0 0
    %629 = vmatpush.bf16.msra.mxu0 0
    %630 = vmatpush.bf16.msra.mxu0 0
    %631 = vmatpush.bf16.msra.mxu0 0
    %632 = vmatpush.bf16.msra.mxu0 %v466
    %633 = vmatpush.bf16.msra.mxu0 %v458
    %634 = vmatmul.bf16.gmra.mxu0 %v554
    %v635 = vpop.f32.mrf.mxu0
    %v636 = vadd.f32 %v622, %v635
    %v637 = vpop.f32.mrf.mxu0
    %v638 = vadd.f32 %v624, %v637
    %639 = vdwg.mxu0
    %640 = vmatpush.bf16.msra.mxu0 %v451
    %641 = vmatpush.bf16.msra.mxu0 %v443
    %642 = vmatpush.bf16.msra.mxu0 %v435
    %643 = vmatpush.bf16.msra.mxu0 %v427
    %644 = vmatpush.bf16.msra.mxu0 %v419
    %645 = vmatpush.bf16.msra.mxu0 %v411
    %646 = vmatpush.bf16.msra.mxu0 %v403
    %647 = vmatpush.bf16.msra.mxu0 %v395
    %648 = vmatmul.bf16.gmra.mxu0 %v149
    %v649 = vpop.f32.mrf.mxu0
    %v650 = vadd.f32 %v130, %v649
    %v651 = vpop.f32.mrf.mxu0
    %v652 = vadd.f32 %v130, %v651
    %653 = vdwg.mxu0
    %654 = vmatpush.bf16.msra.mxu0 0
    %655 = vmatpush.bf16.msra.mxu0 0
    %656 = vmatpush.bf16.msra.mxu0 0
    %657 = vmatpush.bf16.msra.mxu0 0
    %658 = vmatpush.bf16.msra.mxu0 0
    %659 = vmatpush.bf16.msra.mxu0 0
    %660 = vmatpush.bf16.msra.mxu0 %v467
    %661 = vmatpush.bf16.msra.mxu0 %v459
    %662 = vmatmul.bf16.gmra.mxu0 %v554
    %v663 = vpop.f32.mrf.mxu0
    %v664 = vadd.f32 %v650, %v663
    %v665 = vpop.f32.mrf.mxu0
    %v666 = vadd.f32 %v652, %v665
    %667 = vdwg.mxu0
    %668 = vmatpush.bf16.msra.mxu0 %v452
    %669 = vmatpush.bf16.msra.mxu0 %v444
    %670 = vmatpush.bf16.msra.mxu0 %v436
    %671 = vmatpush.bf16.msra.mxu0 %v428
    %672 = vmatpush.bf16.msra.mxu0 %v420
    %673 = vmatpush.bf16.msra.mxu0 %v412
    %674 = vmatpush.bf16.msra.mxu0 %v404
    %675 = vmatpush.bf16.msra.mxu0 %v396
    %676 = vmatmul.bf16.gmra.mxu0 %v149
    %v677 = vpop.f32.mrf.mxu0
    %v678 = vadd.f32 %v131, %v677
    %v679 = vpop.f32.mrf.mxu0
    %v680 = vadd.f32 %v131, %v679
    %681 = vdwg.mxu0
    %682 = vmatpush.bf16.msra.mxu0 0
    %683 = vmatpush.bf16.msra.mxu0 0
    %684 = vmatpush.bf16.msra.mxu0 0
    %685 = vmatpush.bf16.msra.mxu0 0
    %686 = vmatpush.bf16.msra.mxu0 0
    %687 = vmatpush.bf16.msra.mxu0 0
    %688 = vmatpush.bf16.msra.mxu0 %v468
    %689 = vmatpush.bf16.msra.mxu0 %v460
    %690 = vmatmul.bf16.gmra.mxu0 %v554
    %v691 = vpop.f32.mrf.mxu0
    %v692 = vadd.f32 %v678, %v691
    %v693 = vpop.f32.mrf.mxu0
    %v694 = vadd.f32 %v680, %v693
    %695 = vdwg.mxu0
    %696 = vmatpush.bf16.msra.mxu0 %v453
    %697 = vmatpush.bf16.msra.mxu0 %v445
    %698 = vmatpush.bf16.msra.mxu0 %v437
    %699 = vmatpush.bf16.msra.mxu0 %v429
    %700 = vmatpush.bf16.msra.mxu0 %v421
    %701 = vmatpush.bf16.msra.mxu0 %v413
    %702 = vmatpush.bf16.msra.mxu0 %v405
    %703 = vmatpush.bf16.msra.mxu0 %v397
    %704 = vmatmul.bf16.gmra.mxu0 %v149
    %v705 = vpop.f32.mrf.mxu0
    %v706 = vadd.f32 %v132, %v705
    %v707 = vpop.f32.mrf.mxu0
    %v708 = vadd.f32 %v132, %v707
    %709 = vdwg.mxu0
    %710 = vmatpush.bf16.msra.mxu0 0
    %711 = vmatpush.bf16.msra.mxu0 0
    %712 = vmatpush.bf16.msra.mxu0 0
    %713 = vmatpush.bf16.msra.mxu0 0
    %714 = vmatpush.bf16.msra.mxu0 0
    %715 = vmatpush.bf16.msra.mxu0 0
    %716 = vmatpush.bf16.msra.mxu0 %v469
    %717 = vmatpush.bf16.msra.mxu0 %v461
    %718 = vmatmul.bf16.gmra.mxu0 %v554
    %v719 = vpop.f32.mrf.mxu0
    %v720 = vadd.f32 %v706, %v719
    %v721 = vpop.f32.mrf.mxu0
    %v722 = vadd.f32 %v708, %v721
    %723 = vdwg.mxu0
    %724 = vmatpush.bf16.msra.mxu0 %v454
    %725 = vmatpush.bf16.msra.mxu0 %v446
    %726 = vmatpush.bf16.msra.mxu0 %v438
    %727 = vmatpush.bf16.msra.mxu0 %v430
    %728 = vmatpush.bf16.msra.mxu0 %v422
    %729 = vmatpush.bf16.msra.mxu0 %v414
    %730 = vmatpush.bf16.msra.mxu0 %v406
    %731 = vmatpush.bf16.msra.mxu0 %v398
    %732 = vmatmul.bf16.gmra.mxu0 %v149
    %v733 = vpop.f32.mrf.mxu0
    %v734 = vadd.f32 %v133, %v733
    %v735 = vpop.f32.mrf.mxu0
    %v736 = vadd.f32 %v133, %v735
    %737 = vdwg.mxu0
    %738 = vmatpush.bf16.msra.mxu0 0
    %739 = vmatpush.bf16.msra.mxu0 0
    %740 = vmatpush.bf16.msra.mxu0 0
    %741 = vmatpush.bf16.msra.mxu0 0
    %742 = vmatpush.bf16.msra.mxu0 0
    %743 = vmatpush.bf16.msra.mxu0 0
    %744 = vmatpush.bf16.msra.mxu0 %v470
    %745 = vmatpush.bf16.msra.mxu0 %v462
    %746 = vmatmul.bf16.gmra.mxu0 %v554
    %v747 = vpop.f32.mrf.mxu0
    %v748 = vadd.f32 %v734, %v747
    %v749 = vpop.f32.mrf.mxu0
    %v750 = vadd.f32 %v736, %v749
    %751 = vdwg.mxu0
    %752 = vmatpush.bf16.msra.mxu0 %v455
    %753 = vmatpush.bf16.msra.mxu0 %v447
    %754 = vmatpush.bf16.msra.mxu0 %v439
    %755 = vmatpush.bf16.msra.mxu0 %v431
    %756 = vmatpush.bf16.msra.mxu0 %v423
    %757 = vmatpush.bf16.msra.mxu0 %v415
    %758 = vmatpush.bf16.msra.mxu0 %v407
    %759 = vmatpush.bf16.msra.mxu0 %v399
    %760 = vmatmul.bf16.gmra.mxu0 %v149
    %v761 = vpop.f32.mrf.mxu0
    %v762 = vadd.f32 %v134, %v761
    %v763 = vpop.f32.mrf.mxu0
    %v764 = vadd.f32 %v134, %v763
    %765 = vdwg.mxu0
    %766 = vmatpush.bf16.msra.mxu0 0
    %767 = vmatpush.bf16.msra.mxu0 0
    %768 = vmatpush.bf16.msra.mxu0 0
    %769 = vmatpush.bf16.msra.mxu0 0
    %770 = vmatpush.bf16.msra.mxu0 0
    %771 = vmatpush.bf16.msra.mxu0 0
    %772 = vmatpush.bf16.msra.mxu0 %v471
    %773 = vmatpush.bf16.msra.mxu0 %v463
    %774 = vmatmul.bf16.gmra.mxu0 %v554
    %v775 = vpop.f32.mrf.mxu0
    %v776 = vadd.f32 %v762, %v775
    %v777 = vpop.f32.mrf.mxu0
    %v778 = vadd.f32 %v764, %v777
    %779 = vdwg.mxu0
    %v780 = vmax.f32 %v580, 0.0
    %v781 = vmax.f32 %v608, 0.0
    %v782 = vmax.f32 %v636, 0.0
    %v783 = vmax.f32 %v664, 0.0
    %v784 = vmax.f32 %v692, 0.0
    %v785 = vmax.f32 %v720, 0.0
    %v786 = vmax.f32 %v748, 0.0
    %v787 = vmax.f32 %v776, 0.0
    %v788 = vmax.f32 %v582, 0.0
    %v789 = vmax.f32 %v610, 0.0
    %v790 = vmax.f32 %v638, 0.0
    %v791 = vmax.f32 %v666, 0.0
    %v792 = vmax.f32 %v694, 0.0
    %v793 = vmax.f32 %v722, 0.0
    %v794 = vmax.f32 %v750, 0.0
    %v795 = vmax.f32 %v778, 0.0
    %v796 = vmax.f32 %v780, %v782
    %v797 = vmax.f32 %v781, %v783
    %v798 = vmax.f32 %v788, %v790
    %v799 = vmax.f32 %v789, %v791
    %v800 = vmax.f32 %v784, %v786
    %v801 = vmax.f32 %v785, %v787
    %v802 = vmax.f32 %v792, %v794
    %v803 = vmax.f32 %v793, %v795
    %v804 = vmax.f32 %v796, %v800
    %v805 = vmax.f32 %v797, %v801
    %v806 = vmax.f32 %v798, %v802
    %v807 = vmax.f32 %v799, %v803
    %v808 = vpack.c.bf16 %v806, %v804
    %v809 = vpack.c.bf16 %v807, %v805
    %v810 = vld [vmem:[%s3] sm:$0xf]
    %v811 = vld [vmem:[%s3 + $0x4] sm:$0xf]
    %v812 = vld [vmem:[%s3 + $0x8] sm:$0xf]
    %v813 = vld [vmem:[%s3 + $0xc] sm:$0xf]
    %v814 = vld [vmem:[%s3 + $0x10] sm:$0xf]
    %v815 = vld [vmem:[%s3 + $0x14] sm:$0xf]
    %v816 = vld [vmem:[%s3 + $0x18] sm:$0xf]
    %v817 = vld [vmem:[%s3 + $0x1c] sm:$0xf]
    %v818 = vld [vmem:[%s3 + $0x20] sm:$0xf]
    %v819 = vld [vmem:[%s3 + $0x24] sm:$0xf]
    %v820 = vld [vmem:[%s3 + $0x28] sm:$0xf]
    %v821 = vld [vmem:[%s3 + $0x2c] sm:$0xf]
    %v822 = vld [vmem:[%s3 + $0x30] sm:$0xf]
    %v823 = vld [vmem:[%s3 + $0x34] sm:$0xf]
    %v824 = vld [vmem:[%s3 + $0x38] sm:$0xf]
    %v825 = vld [vmem:[%s3 + $0x3c] sm:$0xf]
    %v826 = vld [vmem:[%s3 + $0x40] sm:$0xf]
    %v827 = vld [vmem:[%s3 + $0x44] sm:$0xf]
    %v828 = vld [vmem:[%s3 + $0x48] sm:$0xf]
    %v829 = vld [vmem:[%s3 + $0x4c] sm:$0xf]
    %v830 = vld [vmem:[%s3 + $0x50] sm:$0xf]
    %v831 = vld [vmem:[%s3 + $0x54] sm:$0xf]
    %v832 = vld [vmem:[%s3 + $0x58] sm:$0xf]
    %v833 = vld [vmem:[%s3 + $0x5c] sm:$0xf]
    %v834 = vld [vmem:[%s3 + $0x60] sm:$0xf]
    %v835 = vld [vmem:[%s3 + $0x64] sm:$0xf]
    %v836 = vld [vmem:[%s3 + $0x68] sm:$0xf]
    %v837 = vld [vmem:[%s3 + $0x6c] sm:$0xf]
    %v838 = vld [vmem:[%s3 + $0x70] sm:$0xf]
    %v839 = vld [vmem:[%s3 + $0x74] sm:$0xf]
    %v840 = vld [vmem:[%s3 + $0x78] sm:$0xf]
    %v841 = vld [vmem:[%s3 + $0x7c] sm:$0xf]
    %v842 = vld [vmem:[%s4] sm:$0x1]
    %v844 = vperm.slane %v842, 0
    %v878 = vunpack.c.l.b16 %v810
    %v879 = vunpack.c.l.b16 %v811
    %v880 = vunpack.c.l.b16 %v812
    %v881 = vunpack.c.l.b16 %v813
    %v882 = vunpack.c.l.b16 %v814
    %v883 = vunpack.c.l.b16 %v815
    %v884 = vunpack.c.l.b16 %v816
    %v885 = vunpack.c.l.b16 %v817
    %v886 = vunpack.c.l.b16 %v818
    %v887 = vunpack.c.l.b16 %v819
    %v888 = vunpack.c.l.b16 %v820
    %v889 = vunpack.c.l.b16 %v821
    %v890 = vunpack.c.l.b16 %v822
    %v891 = vunpack.c.l.b16 %v823
    %v892 = vunpack.c.l.b16 %v824
    %v893 = vunpack.c.l.b16 %v825
    %v894 = vunpack.c.l.b16 %v826
    %v895 = vunpack.c.l.b16 %v827
    %v896 = vunpack.c.l.b16 %v828
    %v897 = vunpack.c.l.b16 %v829
    %v898 = vunpack.c.l.b16 %v830
    %v899 = vunpack.c.l.b16 %v831
    %v900 = vunpack.c.l.b16 %v832
    %v901 = vunpack.c.l.b16 %v833
    %v902 = vunpack.c.l.b16 %v834
    %v903 = vunpack.c.l.b16 %v835
    %v904 = vunpack.c.l.b16 %v836
    %v905 = vunpack.c.l.b16 %v837
    %v906 = vunpack.c.l.b16 %v838
    %v907 = vunpack.c.l.b16 %v839
    %v908 = vunpack.c.l.b16 %v840
    %v909 = vunpack.c.l.b16 %v841
    %v910 = vpack.c.b16 %v879, %v878
    %v911 = vpack.c.b16 %v881, %v880
    %v912 = vpack.c.b16 %v883, %v882
    %v913 = vpack.c.b16 %v885, %v884
    %v914 = vpack.c.b16 %v887, %v886
    %v915 = vpack.c.b16 %v889, %v888
    %v916 = vpack.c.b16 %v891, %v890
    %v917 = vpack.c.b16 %v893, %v892
    %v918 = vpack.c.b16 %v895, %v894
    %v919 = vpack.c.b16 %v897, %v896
    %v920 = vpack.c.b16 %v899, %v898
    %v921 = vpack.c.b16 %v901, %v900
    %v922 = vpack.c.b16 %v903, %v902
    %v923 = vpack.c.b16 %v905, %v904
    %v924 = vpack.c.b16 %v907, %v906
    %v925 = vpack.c.b16 %v909, %v908
    %942 = vmatpush.bf16.msra.mxu0 %v917
    %943 = vmatpush.bf16.msra.mxu0 %v916
    %944 = vmatpush.bf16.msra.mxu0 %v915
    %945 = vmatpush.bf16.msra.mxu0 %v914
    %946 = vmatpush.bf16.msra.mxu0 %v913
    %947 = vmatpush.bf16.msra.mxu0 %v912
    %948 = vmatpush.bf16.msra.mxu0 %v911
    %949 = vmatpush.bf16.msra.mxu0 %v910
    %950 = vmatmul.bf16.gmra.mxu0 %v808
    %v951 = vpop.f32.mrf.mxu0
    %v952 = vadd.f32 %v844, %v951
    %v953 = vpop.f32.mrf.mxu0
    %v954 = vadd.f32 %v844, %v953
    %955 = vdwg.mxu0
    %956 = vmatpush.bf16.msra.mxu0 %v925
    %957 = vmatpush.bf16.msra.mxu0 %v924
    %958 = vmatpush.bf16.msra.mxu0 %v923
    %959 = vmatpush.bf16.msra.mxu0 %v922
    %960 = vmatpush.bf16.msra.mxu0 %v921
    %961 = vmatpush.bf16.msra.mxu0 %v920
    %962 = vmatpush.bf16.msra.mxu0 %v919
    %963 = vmatpush.bf16.msra.mxu0 %v918
    %964 = vmatmul.bf16.gmra.mxu0 %v809
    %v965 = vpop.f32.mrf.mxu0
    %v966 = vadd.f32 %v952, %v965
    %v967 = vpop.f32.mrf.mxu0
    %v968 = vadd.f32 %v954, %v967
    %969 = vdwg.mxu0
    %v970 = vmax.f32 %v966, 0.0
    %v971 = vmax.f32 %v968, 0.0
    %v972 = vpack.c.bf16 %v971, %v970
    %v973 = vld [vmem:[%s5] sm:$0xf]
    %v974 = vld [vmem:[%s5 + $0x4] sm:$0xf]
    %v975 = vld [vmem:[%s5 + $0x8] sm:$0xf]
    %v976 = vld [vmem:[%s5 + $0xc] sm:$0xf]
    %v977 = vld [vmem:[%s5 + $0x10] sm:$0xf]
    %v978 = vld [vmem:[%s5 + $0x14] sm:$0xf]
    %v979 = vld [vmem:[%s5 + $0x18] sm:$0xf]
    %v980 = vld [vmem:[%s5 + $0x1c] sm:$0xf]
    %v981 = vld [vmem:[%s5 + $0x20] sm:$0xf]
    %v982 = vld [vmem:[%s5 + $0x24] sm:$0xf]
    %v983 = vld [vmem:[%s5 + $0x28] sm:$0xf]
    %v984 = vld [vmem:[%s5 + $0x2c] sm:$0xf]
    %v985 = vld [vmem:[%s5 + $0x30] sm:$0x3]
    %v986 = vld [vmem:[%s6] sm:$0x1]
    %v988 = vperm.slane %v986, 0
    %v1003 = vunpack.c.l.b16 %v973
    %v1004 = vunpack.c.l.b16 %v974
    %v1005 = vunpack.c.l.b16 %v975
    %v1006 = vunpack.c.l.b16 %v976
    %v1007 = vunpack.c.l.b16 %v977
    %v1008 = vunpack.c.l.b16 %v978
    %v1009 = vunpack.c.l.b16 %v979
    %v1010 = vunpack.c.l.b16 %v980
    %v1011 = vunpack.c.l.b16 %v981
    %v1012 = vunpack.c.l.b16 %v982
    %v1013 = vunpack.c.l.b16 %v983
    %v1014 = vunpack.c.l.b16 %v984
    %v1015 = vunpack.c.l.b16 %v985
    %v1016 = vpack.c.b16 %v1004, %v1003
    %v1017 = vpack.c.b16 %v1006, %v1005
    %v1018 = vpack.c.b16 %v1008, %v1007
    %v1019 = vpack.c.b16 %v1010, %v1009
    %v1020 = vpack.c.b16 %v1012, %v1011
    %v1021 = vpack.c.b16 %v1014, %v1013
    %v1022 = vpack.c.b16 %v1015, %v1015
    %vm1029 = vcmask 818176
    %v1031 = vsel %vm1029, %v972, 0
    %vm1033 = vcmask 1041408
    %v1035 = vsel %vm1033, %v1022, 0
    %1037 = vmatpush.bf16.msra.mxu0 0
    %1038 = vmatpush.bf16.msra.mxu0 %v1035
    %1039 = vmatpush.bf16.msra.mxu0 %v1021
    %1040 = vmatpush.bf16.msra.mxu0 %v1020
    %1041 = vmatpush.bf16.msra.mxu0 %v1019
    %1042 = vmatpush.bf16.msra.mxu0 %v1018
    %1043 = vmatpush.bf16.msra.mxu0 %v1017
    %1044 = vmatpush.bf16.msra.mxu0 %v1016
    %1045 = vmatmul.bf16.gmra.mxu0 %v1031
    %v1046 = vpop.f32.mrf.mxu0
    %v1047 = vadd.f32 %v988, %v1046
    %v1048 = vpop.f32.mrf.mxu0
    %v1049 = vadd.f32 %v988, %v1048
    %1050 = vdwg.mxu0
    %v1051 = vlaneseq
    %v1052 = vand.u32 %v1051, 127
    %vm1053 = vcmp.lt.s32.totalorder %v1052, 40
    %v1054 = vsel %vm1053, %v1047, -1e+30
    %v1055 = vsel %vm1053, %v1049, -1e+30
    %1056 = vmax.xlane.f32.xlu0 %v1054
    %v1057 = vpop.xlane.xlu0 %1056
    %1058 = vmax.xlane.f32.xlu0 %v1055
    %v1059 = vpop.xlane.xlu0 %1058
    %v1060 = vsub.f32 %v1054, %v1057
    %v1061 = vsub.f32 %v1055, %v1059
    %v1062 = vmul.f32 %v1060, 1.442695
    %v1063 = vpow.pop %v1062
    %v1064 = vmul.f32 %v1061, 1.442695
    %v1065 = vpow.pop %v1064
    %v1066 = vsel %vm1053, %v1063, 0.0
    %v1067 = vsel %vm1053, %v1065, 0.0
    %1068 = vadd.xlane.f32.xlu0 %v1066
    %v1069 = vpop.xlane.xlu0 %1068
    %1070 = vadd.xlane.f32.xlu0 %v1067
    %v1071 = vpop.xlane.xlu0 %1070
    %v1072 = vrcp.pop %v1069
    %v1073 = vrcp.pop %v1071
    %v1074 = vmul.f32 %v1066, %v1072
    %v1075 = vmul.f32 %v1067, %v1073
    %v1076 = vsel %vm1053, %v1074, %v1047
    %v1077 = vsel %vm1053, %v1075, %v1049
    %1078 = vst [vmem:[%s7] sm:$0xff] %v1076
    %1079 = vst [vmem:[%s7 + $0x8] sm:$0xff] %v1077
    // Predicated region
    $region34: #{net_forward.1} parent=1 // pred_check
      _
    $region35: #{net_forward.1} parent=1 // pred_check_branch
      %1081 = sbr.rel (0) target = $region37
    $region36: #{net_forward.1} parent=1 // pred_region
      _
    $region37: #{net_forward.1} parent=1 // pred_fallthru
      _
    // Predicated region
    $region38: #{net_forward.1} parent=1 // pred_check
      _
    $region39: #{net_forward.1} parent=1 // pred_check_branch
      %1083 = sbr.rel (0) target = $region41
    $region40: #{net_forward.1} parent=1 // pred_region
      _
    $region41: #{net_forward.1} parent=1 // pred_fallthru
      _
    %1084 = vsyncpa [#allocation3], 1

</llo_original>
